<compile_context>
chip_gen: v7x
topology: tpu7x:2x2x1
jax: 0.10.0
libtpu: 0.0.40
codegen_flags: <defaults>
</compile_context>

<pallas_src>
import math

import jax
import jax.numpy as jnp
from jax.experimental import pallas as pl
from jax.experimental.pallas import tpu as pltpu


# ----------------------------------------------------------------------------
# Kernels
# ----------------------------------------------------------------------------
def _copy_kernel(x_ref, o_ref):
    # Identity copy of one (row_tile, cols) tile (lane-dense, unmasked vst for
    # full tiles; Pallas masks the partial final row-block automatically).
    o_ref[...] = x_ref[...]


def _dma_copy_kernel(x_hbm, o_hbm, sem):
    # Ragged fallback: one direct HBM->HBM DMA of the whole flat buffer.
    # No VMEM staging, no vld/vst round trip, no tiling constraints.
    cp = pltpu.make_async_copy(x_hbm, o_hbm, sem)
    cp.start()
    cp.wait()


# ----------------------------------------------------------------------------
# Helpers
# ----------------------------------------------------------------------------
def _resolve_shape(shape, total):
    """Resolve a torch.view-style shape (supports a single -1)."""
    shape = tuple(int(s) for s in shape)
    if -1 in shape:
        assert shape.count(-1) == 1, "only one -1 allowed in view shape"
        known = 1
        for s in shape:
            if s != -1:
                known *= s
        assert known > 0 and total % known == 0, "view shape incompatible with input size"
        shape = tuple(total // known if s == -1 else s for s in shape)
    assert math.prod(shape) == total, "view shape incompatible with input size"
    return shape


def _round_up(n, m):
    return ((n + m - 1) // m) * m


_BLOCK_TARGET_BYTES = 4 * 1024 * 1024  # ~4 MiB blocks: good on v6e/v7x, harmless on v5e.


def _pick_tiling(total, itemsize):
    """Lane-dense (rows, cols) view of the flat buffer plus a row tile.

    Returns None when total is not a multiple of 128 (ragged — DMA path).
    """
    min_sub = max(8, 32 // itemsize)  # native sublane tile: f32=8, bf16=16, int8/fp8=32

    # Largest lane-dense cols that divides total exactly, preferring a
    # factorization that keeps rows >= min_sub (dense sublanes too).
    cols = None
    for cand in (4096, 2048, 1024, 512, 256, 128):
        if total % cand == 0 and (total // cand) >= min_sub:
            cols = cand
            break
    if cols is None:
        for cand in (4096, 2048, 1024, 512, 256, 128):
            if total % cand == 0:
                cols = cand
                break
    if cols is None:
        return None  # ragged: handled by the HBM->HBM DMA kernel
    rows = total // cols

    # ~4 MiB row blocks, rounded to the dtype's sublane tile.
    target_rows = max(min_sub,
                      (_BLOCK_TARGET_BYTES // (cols * itemsize)) // min_sub * min_sub)
    # Cap at ~half the rows so mid/large tensors give >= 2 "parallel" tiles
    # (keeps both v7x TensorCores streaming).
    half_rows = _round_up(pl.cdiv(rows, 2), min_sub)
    row_tile = min(target_rows, half_rows)
    if row_tile >= rows:
        # Single block covering the whole (small) array: block dim == full dim
        # is always a legal block shape.
        row_tile = rows
    return rows, cols, row_tile


# ----------------------------------------------------------------------------
# Wrapper
# ----------------------------------------------------------------------------
def reshape_pallas(x, shape):
    """y = x.view(shape) — identity copy through a Pallas streaming kernel."""
    total = int(x.size)
    target = _resolve_shape(shape, total)
    if total == 0:
        return jnp.reshape(x, target)

    itemsize = jnp.dtype(x.dtype).itemsize
    bytes_accessed = 2 * total * itemsize
    flat = x.reshape(total)  # metadata-only in XLA

    tiling = _pick_tiling(total, itemsize)

    if tiling is None:
        # Ragged total (not a multiple of 128): single direct HBM->HBM DMA.
        y_flat = pl.pallas_call(
            _dma_copy_kernel,
            out_shape=jax.ShapeDtypeStruct((total,), x.dtype),
            in_specs=[pl.BlockSpec(memory_space=pl.ANY)],
            out_specs=pl.BlockSpec(memory_space=pl.ANY),
            scratch_shapes=[pltpu.SemaphoreType.DMA(())],
            cost_estimate=pl.CostEstimate(
                flops=0, transcendentals=0, bytes_accessed=bytes_accessed),
        )(flat)
        return y_flat.reshape(target)

    rows, cols, row_tile = tiling
    x2 = flat.reshape(rows, cols)
    grid = (pl.cdiv(rows, row_tile),)  # partial final block allowed (masked writes)

    y2 = pl.pallas_call(
        _copy_kernel,
        out_shape=jax.ShapeDtypeStruct((rows, cols), x.dtype),
        grid=grid,
        in_specs=[pl.BlockSpec((row_tile, cols), lambda i: (i, 0))],
        out_specs=pl.BlockSpec((row_tile, cols), lambda i: (i, 0)),
        # Output reuses the input's HBM allocation; callers that donate the
        # input at a jit boundary get a fully in-place "copy".
        input_output_aliases={0: 0},
        compiler_params=pltpu.CompilerParams(
            dimension_semantics=("parallel",),   # megacore-shardable streaming
            vmem_limit_bytes=32 * 1024 * 1024,   # 4x 4 MiB buffers + headroom
        ),
        cost_estimate=pl.CostEstimate(
            flops=0, transcendentals=0, bytes_accessed=bytes_accessed),
    )(x2)

    return y2.reshape(target)


class Reshape:
    """Mirror of the PyTorch module: holds a target shape, applies it in forward."""

    def __init__(self, shape):
        self.shape = tuple(shape)

    def __call__(self, x):
        return reshape_pallas(x, self.shape)

    def __repr__(self):
        return self.__class__.__name__ + " (reshape to size: {})".format(
            " ".join(str(s) for s in self.shape)
        )


if __name__ == "__main__":
    key = jax.random.PRNGKey(0)
    N, C, H, W = 2, 4, 16, 16
    x = jax.random.normal(key, (N, C, H, W), dtype=jnp.float32)

    # Torch7-style flatten-per-sample: Reshape((N, C*H*W)).
    mod = Reshape((N, C * H * W))
    y = mod(x)
    jax.block_until_ready(y)
    y_ref = x.reshape(N, C * H * W)
    assert y.shape == (N, C * H * W)
    assert jnp.array_equal(y, y_ref)

    # -1 dim like torch's view.
    y2 = Reshape((-1, H * W))(x)
    jax.block_until_ready(y2)
    assert jnp.array_equal(y2, x.reshape(-1, H * W))

    # Exercise the cdiv grid: rows=15, row_tile=8 -> 2 tiles, partial last block.
    x3 = jax.random.normal(jax.random.PRNGKey(1), (3, 40, 128), dtype=jnp.float32)
    y3 = Reshape((40, 384))(x3)
    jax.block_until_ready(y3)
    assert jnp.array_equal(y3, x3.reshape(40, 384))

    # bf16: sublane tile 16 -> rows=24, row_tile=16, 2 tiles (second partial).
    x4 = jax.random.normal(
        jax.random.PRNGKey(2), (8, 48, 128), dtype=jnp.float32).astype(jnp.bfloat16)
    y4 = Reshape((48, -1))(x4)
    jax.block_until_ready(y4)
    assert jnp.array_equal(y4, x4.reshape(48, -1))

    print("KERNEL_OK")
</pallas_src>

<mosaic_0001>
module attributes {stable_mosaic.version = 11 : i64} {
  func.func @_copy_kernel(%arg0: i32, %arg1: memref<8x256xf32, #tpu.memory_space<vmem>>, %arg2: memref<8x256xf32, #tpu.memory_space<vmem>>) attributes {dimension_semantics = [#tpu.dimension_semantics<parallel>], iteration_bounds = array<i64: 1>, scalar_prefetch = 0 : i64, scratch_operands = 0 : i64, tpu.core_type = #tpu.core_type<tc>, window_params = [{transform_indices = @transform_0, window_bounds = array<i64: 8, 256>}, {transform_indices = @transform_1, window_bounds = array<i64: 8, 256>}]} {
    %c0 = arith.constant 0 : index
    %c0_0 = arith.constant 0 : index
    %0 = vector.load %arg1[%c0, %c0_0] : memref<8x256xf32, #tpu.memory_space<vmem>>, vector<8x256xf32>
    %c0_1 = arith.constant 0 : index
    %c0_2 = arith.constant 0 : index
    %1 = vector.load %arg2[%c0_1, %c0_2] : memref<8x256xf32, #tpu.memory_space<vmem>>, vector<8x256xf32>
    tpu.vector_store %arg2[%c0_1, %c0_2], %0 {strides = array<i32>} : memref<8x256xf32, #tpu.memory_space<vmem>>, vector<8x256xf32>,
    return
  }
  func.func @transform_0(%arg0: i32) -> (i32, i32) {
    %c0_i32 = arith.constant 0 : i32
    %c0_i32_0 = arith.constant 0 : i32
    return %arg0, %c0_i32 : i32, i32
  }
  func.func @transform_1(%arg0: i32) -> (i32, i32) {
    %c0_i32 = arith.constant 0 : i32
    %c0_i32_0 = arith.constant 0 : i32
    return %arg0, %c0_i32 : i32, i32
  }
}

</mosaic_0001>

<llo_original>
// kernel: tpu_custom_call.1
$region0: #{tpu_custom_call.1}
  #allocation0 [shape = 'u32[]', space=smem, size = 0x4, offset = 0x4, fixed_abs, tag = 'smem constant byte address 0x4 - core index']
  #allocation1 [shape = 'u32[144,128]{1,0:T(1,128)}', space=vmem, size = 0x12000, scoped, tag = 'internal scratch']
  %s0 = inlined_call_operand.hbm [shape: f32[8,256], index: 0, kind: input, shape index: {}, may-alias: {0,1}]
  %s1 = inlined_call_operand.hbm [shape: f32[8,256], index: 1, kind: output, shape index: {}, may-alias: {0,1}]
  %s2 = sld [smem:[#allocation0]]
  $region18: #{tpu_custom_call.1} parent=0
    _
  %s4 = ssub.s32 1, %s2
  %s5 = scalar_select 0, %s4, %s2
  $region1: #{tpu_custom_call.1} parent=0
    #allocation2 [shape = 'u8[8192]{0}', space=vmem, size = 0x2000, scoped, tag = 'input window, operand 0, single buffered']
    #allocation3 [shape = 's32[1]{0}', space=sflag, size = 0x4, scoped, tag = 'scoped memory for tpu_custom_call.1']
    #allocation4 [shape = 's32[1]{0}', space=sflag, size = 0x4, scoped, tag = 'scoped memory for tpu_custom_call.1']
    #allocation5 [shape = 'u8[8192]{0}', space=vmem, size = 0x2000, scoped, tag = 'output window, operand 0, single buffered']
    %6 = vsyncpa [#allocation3], 0
    %7 = vsyncpa [#allocation4], 0
    // Predicated region
    $region2: #{tpu_custom_call.1} parent=1 // pred_check
      _
    $region3: #{tpu_custom_call.1} parent=1 // pred_check_branch
      %9 = sbr.rel (0) target = $region5
    $region4: #{tpu_custom_call.1} parent=1 // pred_region
      %s11 = ssub.s32 256, 256
      %12 = vsyncadd [#allocation3], %s11
      %s14 = sshll.u32 [#allocation2], 4
      %s15 = int_to_ptr.vmem [resolvable:$true] %s14
      %17 = dma.hbm_to_vmem [thread:$0]  %s0, 256, %s15, [#allocation3]
    $region5: #{tpu_custom_call.1} parent=1 // pred_fallthru
      _
    // Predicated region
    $region6: #{tpu_custom_call.1} parent=1 // pred_check
      _
    $region7: #{tpu_custom_call.1} parent=1 // pred_check_branch
      %19 = sbr.rel (0) target = $region9
    $region8: #{tpu_custom_call.1} parent=1 // pred_region
      %20 = dma.done [#allocation3], 256
    $region9: #{tpu_custom_call.1} parent=1 // pred_fallthru
      _
    %v21 = vld [vmem:[#allocation2] sm:$0xff]
    %v22 = vld [vmem:[#allocation2 + $0x8] sm:$0xff]
    %23 = vst [vmem:[#allocation5] sm:$0xff] %v21
    %24 = vst [vmem:[#allocation5 + $0x8] sm:$0xff] %v22
    // Predicated region
    $region10: #{tpu_custom_call.1} parent=1 // pred_check
      _
    $region11: #{tpu_custom_call.1} parent=1 // pred_check_branch
      %26 = sbr.rel (0) target = $region13
    $region12: #{tpu_custom_call.1} parent=1 // pred_region
      %s28 = ssub.s32 256, 256
      %29 = vsyncadd [#allocation4], %s28
      %s31 = sshll.u32 [#allocation5], 4
      %s32 = int_to_ptr.vmem [resolvable:$true] %s31
      %34 = dma.vmem_to_hbm [thread:$0]  %s32, 256, %s1, [#allocation4]
    $region13: #{tpu_custom_call.1} parent=1 // pred_fallthru
      _
    // Predicated region
    $region14: #{tpu_custom_call.1} parent=1 // pred_check
      _
    $region15: #{tpu_custom_call.1} parent=1 // pred_check_branch
      %36 = sbr.rel (0) target = $region17
    $region16: #{tpu_custom_call.1} parent=1 // pred_region
      %37 = dma.done [#allocation4], 256
    $region17: #{tpu_custom_call.1} parent=1 // pred_fallthru
      _
    %38 = vsyncpa [#allocation3], 1
    %39 = vsyncpa [#allocation4], 1

</llo_original>
